<compile_context>
chip_gen: v7x
topology: tpu7x:2x2x1
jax: 0.10.0
libtpu: 0.0.40
codegen_flags: <defaults>
</compile_context>

<pallas_src>
import functools

import jax
import jax.numpy as jnp
import numpy as np
from jax.experimental import pallas as pl
from jax.experimental.pallas import tpu as pltpu

_LANES = 128
_MATS_PER_ROW = _LANES // 16   # 8 flattened 4x4 matrices per lane row
_STATS = 5                     # sum x, sum y, sum xy, sum x^2, sum y^2


def _round_up(x, m):
    return ((x + m - 1) // m) * m


def _num_core_splits():
    """2 partial-accumulator splits only on 2-TensorCore chips (v7x)."""
    try:
        kind = jax.devices()[0].device_kind.lower()
    except Exception:
        return 1
    return 2 if "v7" in kind else 1


def _masked_stats_kernel(yt_ref, yp_ref, mask_ref, expand_ref, out_ref, *,
                         nb, npc, tr):
    """Accumulate masked elementwise sums for one (TR, 128) lane-dense tile."""
    c = pl.program_id(0)          # core split        ("parallel")
    i = pl.program_id(1)          # block within split ("arbitrary", reduction)

    @pl.when(i == 0)
    def _init():
        out_ref[...] = jnp.zeros_like(out_ref)

    gb = c * npc + i              # global block id; gb >= nb -> phantom block

    @pl.when(gb < nb)
    def _accumulate():
        # Per-matrix mask (TR, 8) -> per-element mask (TR, 128) with a tiny 0/1
        # selection matmul on the otherwise-idle MXU (expand is a resident
        # constant -- DMA'd once, never rebuilt per step).
        m = jnp.dot(mask_ref[...], expand_ref[...],
                    preferred_element_type=jnp.float32)
        keep = m > 0.5

        # Cast to f32 only after the tile is in VMEM (native dtype in HBM);
        # SELECT (not multiply) so ragged-edge garbage can never leak in.
        x = jnp.where(keep, yt_ref[...].astype(jnp.float32), 0.0)   # y_true
        y = jnp.where(keep, yp_ref[...].astype(jnp.float32), 0.0)   # y_pred

        # Fold TR rows -> 8 sublanes with plain vreg adds (no cross-sublane XLU
        # reduce in the hot path), then ONE aligned full-tile accumulator RMW.
        x3 = x.reshape(tr // 8, 8, _LANES)
        y3 = y.reshape(tr // 8, 8, _LANES)
        upd = jnp.concatenate(
            [x3.sum(axis=0),
             y3.sum(axis=0),
             (x3 * y3).sum(axis=0),
             (x3 * x3).sum(axis=0),
             (y3 * y3).sum(axis=0)],
            axis=0)                                                  # (40, 128)
        out_ref[...] += upd


def _masked_stats(y_true, y_pred, lengths):
    """y_true/y_pred: (B, M, 4, 4); lengths: (B,) -> ((5, 16) masked sums, count)."""
    B, M = y_true.shape[0], y_true.shape[1]
    G = B * M
    G8 = _round_up(G, _MATS_PER_ROW)
    RT = G8 // _MATS_PER_ROW                      # lane-dense rows
    dtype_bytes = jnp.dtype(y_true.dtype).itemsize

    # Tile rows sized so that 2 inputs x 2 buffers + the lane-padded f32 mask
    # (a (TR,8) block occupies (TR,128)*4 B in VMEM!) stay ~<= 20 MiB, capped at
    # 8192 rows and floored at one (8,128) tile.
    per_row_vmem = 2 * (2 * _LANES * dtype_bytes + _LANES * 4)
    tr_cap = max(8, min(8192, ((20 << 20) // per_row_vmem) // 8 * 8))
    TR = min(tr_cap, _round_up(RT, 8))
    nb = pl.cdiv(RT, TR)                          # real data blocks
    splits = _num_core_splits() if nb > 1 else 1  # never phantom-read tiny inputs
    npc = pl.cdiv(nb, splits)                     # blocks per core split

    # Lane-dense views (contiguous reshapes; pad rows only if B*M % 8 != 0).
    yt2 = y_true.reshape(G, 16)
    yp2 = y_pred.reshape(G, 16)
    if G8 != G:
        yt2 = jnp.pad(yt2, ((0, G8 - G), (0, 0)))
        yp2 = jnp.pad(yp2, ((0, G8 - G), (0, 0)))
    yt_ld = yt2.reshape(RT, _LANES)
    yp_ld = yp2.reshape(RT, _LANES)

    # Per-matrix validity mask (valid matrices are [0, n-1) per batch), padded
    # with zeros to full blocks so ragged-edge tiles never contribute.
    nv = jnp.clip(lengths.astype(jnp.int32) - 1, 0, M)             # (B,)
    g = jnp.arange(G8, dtype=jnp.int32)
    b_idx = jnp.clip(g // M, 0, B - 1)
    valid = (g < G) & ((g % M) < nv[b_idx])
    mask = valid.astype(jnp.float32).reshape(RT, _MATS_PER_ROW)
    mask = jnp.pad(mask, ((0, nb * TR - RT), (0, 0)))

    # Resident 0/1 selection matrix: expand[g, l] = 1 iff lane l belongs to
    # matrix slot g (l // 16 == g).
    lane = np.arange(_LANES)
    expand_np = (lane[None, :] // 16 == np.arange(_MATS_PER_ROW)[:, None])
    expand = jnp.asarray(expand_np.astype(np.float32))              # (8, 128)

    def blk(c, i):  # clamp phantom blocks; kernel skips their accumulation
        return (jnp.minimum(c * npc + i, nb - 1), 0)

    kernel = functools.partial(_masked_stats_kernel, nb=nb, npc=npc, tr=TR)

    out = pl.pallas_call(
        kernel,
        out_shape=jax.ShapeDtypeStruct((splits * _STATS * 8, _LANES), jnp.float32),
        grid_spec=pl.GridSpec(
            grid=(splits, npc),
            in_specs=[
                pl.BlockSpec((TR, _LANES), blk),
                pl.BlockSpec((TR, _LANES), blk),
                pl.BlockSpec((TR, _MATS_PER_ROW), blk),
                pl.BlockSpec((_MATS_PER_ROW, _LANES), lambda c, i: (0, 0)),
            ],
            out_specs=pl.BlockSpec((_STATS * 8, _LANES), lambda c, i: (c, 0)),
        ),
        compiler_params=pltpu.CompilerParams(
            dimension_semantics=("parallel", "arbitrary"),
            vmem_limit_bytes=32 * 1024 * 1024,
        ),
        cost_estimate=pl.CostEstimate(
            flops=10 * G * 16,
            transcendentals=0,
            bytes_accessed=2 * G * 16 * dtype_bytes
            + mask.size * 4 + expand.size * 4
            + splits * _STATS * 8 * _LANES * 4,
        ),
    )(yt_ld, yp_ld, mask, expand)

    # Combine per-core partials, fold 8 sublanes and the 8 interleaved matrix
    # slots -> 16 elements (tiny, done once in XLA glue).
    stats = out.reshape(splits, _STATS, 8, _LANES).sum(axis=(0, 2))     # (5, 128)
    per_elem = stats.reshape(_STATS, _MATS_PER_ROW, 16).sum(axis=1)     # (5, 16)
    rows = jnp.sum(nv).astype(jnp.float32)        # valid-matrix count (scalar)
    return per_elem, rows


def _pcc_from_sums(sx, sy, sxy, sx2, sy2, n):
    mean_x = sx / n
    mean_y = sy / n
    cov = sxy / n - mean_x * mean_y
    # torch .std() is unbiased (ddof=1); clamp guards f32 cancellation.
    var_x = jnp.maximum(sx2 - n * mean_x * mean_x, 0.0) / (n - 1.0)
    var_y = jnp.maximum(sy2 - n * mean_y * mean_y, 0.0) / (n - 1.0)
    return cov / (jnp.sqrt(var_x) * jnp.sqrt(var_y) + 1e-8)


@functools.partial(jax.jit, static_argnames=("split_elements",))
def masked_pcc_loss(y_pred, y_true, lengths, split_elements=False):
    """
    y_pred, y_true: (B, N-1, 4, 4); lengths: (B,)
    Returns scalar loss = 1 - PCC, matching MaskedPCCLoss.forward.
    """
    per_elem, rows = _masked_stats(y_true, y_pred, lengths)
    sum_x, sum_y, sum_xy, sum_x2, sum_y2 = (per_elem[k] for k in range(5))

    if split_elements:
        # per-element PCC over `rows` samples, then average over the 16 entries
        pcc = _pcc_from_sums(sum_x, sum_y, sum_xy, sum_x2, sum_y2, rows)
        return 1.0 - jnp.mean(pcc)
    n = rows * 16.0
    pcc = _pcc_from_sums(jnp.sum(sum_x), jnp.sum(sum_y), jnp.sum(sum_xy),
                         jnp.sum(sum_x2), jnp.sum(sum_y2), n)
    return 1.0 - pcc


def _reference_loss_np(y_pred, y_true, lengths, split_elements):
    """NumPy/f64 port of the PyTorch reference, for a correctness cross-check."""
    yp = np.asarray(y_pred, dtype=np.float64)
    yt = np.asarray(y_true, dtype=np.float64)
    ln = np.asarray(lengths)
    B, M = yp.shape[0], yp.shape[1]
    rows_p, rows_t = [], []
    for b in range(B):
        n = int(ln[b])
        if n > 1:
            k = min(n - 1, M)
            rows_p.append(yp[b, :k].reshape(k, 16))
            rows_t.append(yt[b, :k].reshape(k, 16))
    P = np.concatenate(rows_p, axis=0)
    T = np.concatenate(rows_t, axis=0)

    def pcc(x, y):
        mx, my = x.mean(), y.mean()
        cov = (x * y).mean() - mx * my
        return cov / (x.std(ddof=1) * y.std(ddof=1) + 1e-8)

    if split_elements:
        p = np.mean([pcc(T[:, i], P[:, i]) for i in range(16)])
    else:
        p = pcc(T.reshape(-1), P.reshape(-1))
    return 1.0 - p


if __name__ == "__main__":
    key = jax.random.PRNGKey(0)
    k1, k2 = jax.random.split(key)

    B, M = 2, 8   # y_pred / y_true: (B, N-1, 4, 4) with N-1 = 8
    y_pred = jax.random.normal(k1, (B, M, 4, 4), dtype=jnp.float32)
    y_true = jax.random.normal(k2, (B, M, 4, 4), dtype=jnp.float32)
    lengths = jnp.array([7, 3], dtype=jnp.int32)  # 6 and 2 valid matrices

    loss = masked_pcc_loss(y_pred, y_true, lengths, split_elements=False)
    jax.block_until_ready(loss)
    loss_split = masked_pcc_loss(y_pred, y_true, lengths, split_elements=True)
    jax.block_until_ready(loss_split)

    # Cross-check against the NumPy port of the PyTorch reference.
    ref = _reference_loss_np(y_pred, y_true, lengths, split_elements=False)
    ref_split = _reference_loss_np(y_pred, y_true, lengths, split_elements=True)
    assert abs(float(loss) - float(ref)) < 1e-3, (float(loss), float(ref))
    assert abs(float(loss_split) - float(ref_split)) < 1e-3, (
        float(loss_split), float(ref_split))

    print("KERNEL_OK")
</pallas_src>

<mosaic_0001>
module attributes {stable_mosaic.version = 11 : i64} {
  func.func @_masked_stats_kernel(%arg0: i32, %arg1: i32, %arg2: memref<8x128xf32, #tpu.memory_space<vmem>>, %arg3: memref<8x128xf32, #tpu.memory_space<vmem>>, %arg4: memref<8x8xf32, #tpu.memory_space<vmem>>, %arg5: memref<8x128xf32, #tpu.memory_space<vmem>>, %arg6: memref<40x128xf32, #tpu.memory_space<vmem>>) attributes {dimension_semantics = [#tpu.dimension_semantics<parallel>, #tpu.dimension_semantics<arbitrary>], iteration_bounds = array<i64: 1, 1>, scalar_prefetch = 0 : i64, scratch_operands = 0 : i64, tpu.core_type = #tpu.core_type<tc>, window_params = [{transform_indices = @transform_0, window_bounds = array<i64: 8, 128>}, {transform_indices = @transform_1, window_bounds = array<i64: 8, 128>}, {transform_indices = @transform_2, window_bounds = array<i64: 8, 8>}, {pipeline_mode = #tpu.pipeline_mode<synchronous>, transform_indices = @transform_3, window_bounds = array<i64: 8, 128>}, {transform_indices = @transform_4, window_bounds = array<i64: 40, 128>}]} {
    %c0_i32 = arith.constant 0 : i32
    %0 = arith.cmpi eq, %arg1, %c0_i32 : i32
    %1 = arith.extui %0 : i1 to i32
    %c0_i32_0 = arith.constant 0 : i32
    %2 = arith.cmpi ne, %1, %c0_i32_0 : i32
    scf.if %2 {
      %cst = arith.constant 0.000000e+00 : f32
      %8 = vector.broadcast %cst : f32 to vector<40x128xf32>
      %c0 = arith.constant 0 : index
      %c0_3 = arith.constant 0 : index
      %9 = vector.load %arg6[%c0, %c0_3] : memref<40x128xf32, #tpu.memory_space<vmem>>, vector<40x128xf32>
      tpu.vector_store %arg6[%c0, %c0_3], %8 {strides = array<i32>} : memref<40x128xf32, #tpu.memory_space<vmem>>, vector<40x128xf32>,
    } else {
    }
    %c1_i32 = arith.constant 1 : i32
    %3 = arith.muli %arg0, %c1_i32 : i32
    %4 = arith.addi %3, %arg1 : i32
    %c1_i32_1 = arith.constant 1 : i32
    %5 = arith.cmpi slt, %4, %c1_i32_1 : i32
    %6 = arith.extui %5 : i1 to i32
    %c0_i32_2 = arith.constant 0 : i32
    %7 = arith.cmpi ne, %6, %c0_i32_2 : i32
    scf.if %7 {
      %c0 = arith.constant 0 : index
      %c0_3 = arith.constant 0 : index
      %8 = vector.load %arg4[%c0, %c0_3] : memref<8x8xf32, #tpu.memory_space<vmem>>, vector<8x8xf32>
      %c0_4 = arith.constant 0 : index
      %c0_5 = arith.constant 0 : index
      %9 = vector.load %arg5[%c0_4, %c0_5] : memref<8x128xf32, #tpu.memory_space<vmem>>, vector<8x128xf32>
      %cst = arith.constant dense<0.000000e+00> : vector<8x128xf32>
      %10 = tpu.matmul %8, %9, %cst {dimension_numbers = #tpu.dot_dimension_numbers<[1], [0], [0], [1], [0, 0, 1, 1], [], []>} : vector<8x8xf32>, vector<8x128xf32>, vector<8x128xf32> -> vector<8x128xf32>
      %cst_6 = arith.constant 5.000000e-01 : f32
      %11 = vector.broadcast %cst_6 : f32 to vector<8x128xf32>
      %12 = arith.cmpf ogt, %10, %11 : vector<8x128xf32>
      %c0_7 = arith.constant 0 : index
      %c0_8 = arith.constant 0 : index
      %13 = vector.load %arg2[%c0_7, %c0_8] : memref<8x128xf32, #tpu.memory_space<vmem>>, vector<8x128xf32>
      %cst_9 = arith.constant 0.000000e+00 : f32
      %14 = vector.broadcast %cst_9 : f32 to vector<8x128xf32>
      %15 = arith.select %12, %13, %14 : vector<8x128xi1>, vector<8x128xf32>
      %c0_10 = arith.constant 0 : index
      %c0_11 = arith.constant 0 : index
      %16 = vector.load %arg3[%c0_10, %c0_11] : memref<8x128xf32, #tpu.memory_space<vmem>>, vector<8x128xf32>
      %cst_12 = arith.constant 0.000000e+00 : f32
      %17 = vector.broadcast %cst_12 : f32 to vector<8x128xf32>
      %18 = arith.select %12, %16, %17 : vector<8x128xi1>, vector<8x128xf32>
      %19 = vector.shape_cast %15 : vector<8x128xf32> to vector<1x8x128xf32>
      %20 = vector.shape_cast %18 : vector<8x128xf32> to vector<1x8x128xf32>
      %cst_13 = arith.constant dense<0.000000e+00> : vector<8x128xf32>
      %21 = vector.multi_reduction <add>, %19, %cst_13 [0] : vector<1x8x128xf32> to vector<8x128xf32>
      %cst_14 = arith.constant dense<0.000000e+00> : vector<8x128xf32>
      %22 = vector.multi_reduction <add>, %20, %cst_14 [0] : vector<1x8x128xf32> to vector<8x128xf32>
      %23 = arith.mulf %19, %20 : vector<1x8x128xf32>
      %cst_15 = arith.constant dense<0.000000e+00> : vector<8x128xf32>
      %24 = vector.multi_reduction <add>, %23, %cst_15 [0] : vector<1x8x128xf32> to vector<8x128xf32>
      %25 = arith.mulf %19, %19 : vector<1x8x128xf32>
      %cst_16 = arith.constant dense<0.000000e+00> : vector<8x128xf32>
      %26 = vector.multi_reduction <add>, %25, %cst_16 [0] : vector<1x8x128xf32> to vector<8x128xf32>
      %27 = arith.mulf %20, %20 : vector<1x8x128xf32>
      %cst_17 = arith.constant dense<0.000000e+00> : vector<8x128xf32>
      %28 = vector.multi_reduction <add>, %27, %cst_17 [0] : vector<1x8x128xf32> to vector<8x128xf32>
      %29 = tpu.concatenate %21, %22, %24, %26, %28 in 0 : vector<8x128xf32>, vector<8x128xf32>, vector<8x128xf32>, vector<8x128xf32>, vector<8x128xf32> -> vector<40x128xf32>
      %c0_18 = arith.constant 0 : index
      %c0_19 = arith.constant 0 : index
      %30 = vector.load %arg6[%c0_18, %c0_19] : memref<40x128xf32, #tpu.memory_space<vmem>>, vector<40x128xf32>
      %31 = arith.addf %30, %29 : vector<40x128xf32>
      %c0_20 = arith.constant 0 : index
      %c0_21 = arith.constant 0 : index
      %32 = vector.load %arg6[%c0_20, %c0_21] : memref<40x128xf32, #tpu.memory_space<vmem>>, vector<40x128xf32>
      tpu.vector_store %arg6[%c0_20, %c0_21], %31 {strides = array<i32>} : memref<40x128xf32, #tpu.memory_space<vmem>>, vector<40x128xf32>,
    } else {
    }
    return
  }
  func.func @transform_0(%arg0: i32, %arg1: i32) -> (i32, i32) {
    %c1_i32 = arith.constant 1 : i32
    %0 = arith.muli %arg0, %c1_i32 : i32
    %1 = arith.addi %0, %arg1 : i32
    %c0_i32 = arith.constant 0 : i32
    %2 = arith.minsi %1, %c0_i32 : i32
    %c0_i32_0 = arith.constant 0 : i32
    %c0_i32_1 = arith.constant 0 : i32
    return %2, %c0_i32_0 : i32, i32
  }
  func.func @transform_1(%arg0: i32, %arg1: i32) -> (i32, i32) {
    %c1_i32 = arith.constant 1 : i32
    %0 = arith.muli %arg0, %c1_i32 : i32
    %1 = arith.addi %0, %arg1 : i32
    %c0_i32 = arith.constant 0 : i32
    %2 = arith.minsi %1, %c0_i32 : i32
    %c0_i32_0 = arith.constant 0 : i32
    %c0_i32_1 = arith.constant 0 : i32
    return %2, %c0_i32_0 : i32, i32
  }
  func.func @transform_2(%arg0: i32, %arg1: i32) -> (i32, i32) {
    %c1_i32 = arith.constant 1 : i32
    %0 = arith.muli %arg0, %c1_i32 : i32
    %1 = arith.addi %0, %arg1 : i32
    %c0_i32 = arith.constant 0 : i32
    %2 = arith.minsi %1, %c0_i32 : i32
    %c0_i32_0 = arith.constant 0 : i32
    %c0_i32_1 = arith.constant 0 : i32
    return %2, %c0_i32_0 : i32, i32
  }
  func.func @transform_3(%arg0: i32, %arg1: i32) -> (i32, i32) {
    %c0_i32 = arith.constant 0 : i32
    %c0_i32_0 = arith.constant 0 : i32
    %c0_i32_1 = arith.constant 0 : i32
    return %c0_i32, %c0_i32_0 : i32, i32
  }
  func.func @transform_4(%arg0: i32, %arg1: i32) -> (i32, i32) {
    %c0_i32 = arith.constant 0 : i32
    %c0_i32_0 = arith.constant 0 : i32
    return %arg0, %c0_i32 : i32, i32
  }
}

</mosaic_0001>

<llo_original>
// kernel: masked_pcc_loss.1
$region0: #{masked_pcc_loss.1}
  #allocation0 [shape = 'u32[]', space=smem, size = 0x4, offset = 0x4, fixed_abs, tag = 'smem constant byte address 0x4 - core index']
  #allocation1 [shape = 'u32[144,128]{1,0:T(1,128)}', space=vmem, size = 0x12000, scoped, tag = 'internal scratch']
  %s0 = inlined_call_operand.vmem [shape: f32[2,128], index: 0, kind: input, shape index: {}]
  %s1 = inlined_call_operand.vmem [shape: f32[2,128], index: 1, kind: input, shape index: {}]
  %s2 = inlined_call_operand.vmem [shape: f32[8,8], index: 2, kind: input, shape index: {}]
  %s3 = inlined_call_operand.vmem [shape: f32[8,128], index: 3, kind: input, shape index: {}]
  %s4 = inlined_call_operand.vmem [shape: f32[40,128], index: 4, kind: output, shape index: {}]
  %s5 = sld [smem:[#allocation0]]
  $region34: #{masked_pcc_loss.1} parent=0
    _
  %s7 = ssub.s32 1, %s5
  %s8 = scalar_select 0, %s7, %s5
  // Predicated region
  $region2: #{masked_pcc_loss.1} parent=0 // pred_check
    _
  $region3: #{masked_pcc_loss.1} parent=0 // pred_check_branch
    %10 = sbr.rel (0) target = $region5
  $region4: #{masked_pcc_loss.1} parent=0 // pred_region
    %s11 = sadd.s32 0, 0
    %p12 = scmp.lt.s32.totalorder %s11, 0
    %s13 = scalar_select %p12, %s11, 0
    %s14 = smul.u32 4, %s13
    %s15 = ssub.s32 1, %s14
    %s16 = smul.u32 32, %s15
    %p17 = scmp.lt.s32.totalorder %s14, 0
    %s18 = scalar_select %p17, %s14, 0
    %s19 = smul.addr %s18, 2
    %s20 = scalar_lea.vmem %s0, %s19
    %s21 = sadd.s32 0, 0
    %p22 = scmp.lt.s32.totalorder %s21, 0
    %s23 = scalar_select %p22, %s21, 0
    %s24 = smul.u32 4, %s23
    %s25 = ssub.s32 1, %s24
    %s26 = smul.u32 32, %s25
  $region5: #{masked_pcc_loss.1} parent=0 // pred_fallthru
    _
  // Predicated region
  $region6: #{masked_pcc_loss.1} parent=0 // pred_check
    _
  $region7: #{masked_pcc_loss.1} parent=0 // pred_check_branch
    %28 = sbr.rel (0) target = $region9
  $region8: #{masked_pcc_loss.1} parent=0 // pred_region
    %s29 = sadd.s32 0, 0
    %p30 = scmp.lt.s32.totalorder %s29, 0
    %s31 = scalar_select %p30, %s29, 0
    %s32 = smul.u32 4, %s31
    %s33 = ssub.s32 1, %s32
    %s34 = smul.u32 32, %s33
    %p35 = scmp.lt.s32.totalorder %s32, 0
    %s36 = scalar_select %p35, %s32, 0
    %s37 = smul.addr %s36, 2
    %s38 = scalar_lea.vmem %s1, %s37
    %s39 = sadd.s32 0, 0
    %p40 = scmp.lt.s32.totalorder %s39, 0
    %s41 = scalar_select %p40, %s39, 0
    %s42 = smul.u32 4, %s41
    %s43 = ssub.s32 1, %s42
    %s44 = smul.u32 32, %s43
  $region9: #{masked_pcc_loss.1} parent=0 // pred_fallthru
    _
  // Predicated region
  $region10: #{masked_pcc_loss.1} parent=0 // pred_check
    _
  $region11: #{masked_pcc_loss.1} parent=0 // pred_check_branch
    %46 = sbr.rel (0) target = $region13
  $region12: #{masked_pcc_loss.1} parent=0 // pred_region
    %s47 = sadd.s32 0, 0
    %p48 = scmp.lt.s32.totalorder %s47, 0
    %s49 = scalar_select %p48, %s47, 0
    %p50 = scmp.lt.s32.totalorder %s49, 0
    %s51 = scalar_select %p50, %s49, 0
    %s52 = smul.addr %s51, 8
    %s53 = scalar_lea.vmem %s2, %s52
    %s54 = sadd.s32 0, 0
    %p55 = scmp.lt.s32.totalorder %s54, 0
    %s56 = scalar_select %p55, %s54, 0
  $region13: #{masked_pcc_loss.1} parent=0 // pred_fallthru
    _
  // Predicated region
  $region14: #{masked_pcc_loss.1} parent=0 // pred_check
    _
  $region15: #{masked_pcc_loss.1} parent=0 // pred_check_branch
    %58 = sbr.rel (0) target = $region17
  $region16: #{masked_pcc_loss.1} parent=0 // pred_region
    _
  $region17: #{masked_pcc_loss.1} parent=0 // pred_fallthru
    _
  %s59 = sadd.s32 0, 0
  %p60 = scmp.lt.s32.totalorder %s59, 0
  %s61 = scalar_select %p60, %s59, 0
  %s62 = smul.u32 4, %s61
  %s63 = ssub.s32 1, %s62
  %s64 = smul.u32 32, %s63
  %p65 = scmp.lt.s32.totalorder %s62, 0
  %s66 = scalar_select %p65, %s62, 0
  %s67 = smul.addr %s66, 2
  %s68 = scalar_lea.vmem %s0, %s67
  %s69 = sadd.s32 0, 0
  %p70 = scmp.lt.s32.totalorder %s69, 0
  %s71 = scalar_select %p70, %s69, 0
  %s72 = smul.u32 4, %s71
  %s73 = ssub.s32 1, %s72
  %s74 = smul.u32 32, %s73
  %p75 = scmp.lt.s32.totalorder %s72, 0
  %s76 = scalar_select %p75, %s72, 0
  %s77 = smul.addr %s76, 2
  %s78 = scalar_lea.vmem %s1, %s77
  %s79 = sadd.s32 0, 0
  %p80 = scmp.lt.s32.totalorder %s79, 0
  %s81 = scalar_select %p80, %s79, 0
  %p82 = scmp.lt.s32.totalorder %s81, 0
  %s83 = scalar_select %p82, %s81, 0
  %s84 = smul.addr %s83, 8
  %s85 = scalar_lea.vmem %s2, %s84
  %s86 = sadd.s32 0, 0
  %p87 = scmp.lt.s32.totalorder %s86, 0
  %s88 = scalar_select %p87, %s86, 0
  %s89 = smul.u32 4, %s88
  %s90 = ssub.s32 1, %s89
  %s91 = smul.u32 32, %s90
  %p92 = scmp.lt.s32.totalorder %s89, 0
  %s93 = scalar_select %p92, %s89, 0
  %s94 = smul.addr %s93, 2
  %s95 = scalar_lea.vmem %s0, %s94
  %s96 = sadd.s32 0, 0
  %p97 = scmp.lt.s32.totalorder %s96, 0
  %s98 = scalar_select %p97, %s96, 0
  %s99 = smul.u32 4, %s98
  %s100 = ssub.s32 1, %s99
  %s101 = smul.u32 32, %s100
  %s102 = sadd.s32 0, 0
  %p103 = scmp.lt.s32.totalorder %s102, 0
  %s104 = scalar_select %p103, %s102, 0
  %s105 = smul.u32 4, %s104
  %s106 = ssub.s32 1, %s105
  %s107 = smul.u32 32, %s106
  %p108 = scmp.lt.s32.totalorder %s105, 0
  %s109 = scalar_select %p108, %s105, 0
  %s110 = smul.addr %s109, 2
  %s111 = scalar_lea.vmem %s1, %s110
  %s112 = sadd.s32 0, 0
  %p113 = scmp.lt.s32.totalorder %s112, 0
  %s114 = scalar_select %p113, %s112, 0
  %s115 = smul.u32 4, %s114
  %s116 = ssub.s32 1, %s115
  %s117 = smul.u32 32, %s116
  %s118 = sadd.s32 0, 0
  %p119 = scmp.lt.s32.totalorder %s118, 0
  %s120 = scalar_select %p119, %s118, 0
  %p121 = scmp.lt.s32.totalorder %s120, 0
  %s122 = scalar_select %p121, %s120, 0
  %s123 = smul.addr %s122, 8
  %s124 = scalar_lea.vmem %s2, %s123
  %s125 = sadd.s32 0, 0
  %p126 = scmp.lt.s32.totalorder %s125, 0
  %s127 = scalar_select %p126, %s125, 0
  %p128 = scmp.eq.s32.totalorder 0, 0
  // Predicated region
  $region18: #{masked_pcc_loss.1} parent=0 // pred_check
    %p129 = pneg %p128
  $region19: #{masked_pcc_loss.1} parent=0 // pred_check_branch
    %131 = sbr.rel (%p129) target = $region21
  $region20: #{masked_pcc_loss.1} parent=0 // pred_region
    %132 = vst [vmem:[%s4] sm:$0xff] 0.0
    %133 = vst [vmem:[%s4 + $0x8] sm:$0xff] 0.0
    %134 = vst [vmem:[%s4 + $0x10] sm:$0xff] 0.0
    %135 = vst [vmem:[%s4 + $0x18] sm:$0xff] 0.0
    %136 = vst [vmem:[%s4 + $0x20] sm:$0xff] 0.0
  $region21: #{masked_pcc_loss.1} parent=0 // pred_fallthru
    _
  %s137 = sadd.s32 0, 0
  %p138 = scmp.lt.s32.totalorder %s137, 1
  // Predicated region
  $region22: #{masked_pcc_loss.1} parent=0 // pred_check
    %p139 = pneg %p138
  $region23: #{masked_pcc_loss.1} parent=0 // pred_check_branch
    %141 = sbr.rel (%p139) target = $region25
  $region24: #{masked_pcc_loss.1} parent=0 // pred_region
    %v142 = vld [vmem:[%s124] sm:$0xff]
    %v143 = vld [vmem:[%s3] sm:$0xff]
    %vm144 = vcmask 64512
    %v146 = vsel %vm144, %v142, 0
    %148 = vmatprep.subr.mxu0 0.0
    %149 = vmatpush1.msra.mxu0 %v143
    %150 = vmatprep.subr.mxu0 0.0
    %151 = vmatpush1.msra.mxu0 0.0
    %152 = vmatprep.subr.mxu0 0.0
    %153 = vmatpush1.msra.mxu0 0.0
    %154 = vmatprep.subr.mxu0 0.0
    %155 = vmatpush1.msra.mxu0 0.0
    %156 = vmatprep.subr.mxu0 0.0
    %157 = vmatpush1.msra.mxu0 0.0
    %158 = vmatprep.subr.mxu0 0.0
    %159 = vmatpush1.msra.mxu0 0.0
    %160 = vmatprep.subr.mxu0 0.0
    %161 = vmatpush1.msra.mxu0 0.0
    %162 = vmatprep.subr.mxu0 0.0
    %163 = vmatpush1.msra.mxu0 0.0
    %164 = vmatprep.subr.mxu0 0.0
    %165 = vmatpush1.msra.mxu0 0.0
    %166 = vmatprep.subr.mxu0 0.0
    %167 = vmatpush1.msra.mxu0 0.0
    %168 = vmatprep.subr.mxu0 0.0
    %169 = vmatpush1.msra.mxu0 0.0
    %170 = vmatprep.subr.mxu0 0.0
    %171 = vmatpush1.msra.mxu0 0.0
    %172 = vmatprep.subr.mxu0 0.0
    %173 = vmatpush1.msra.mxu0 0.0
    %174 = vmatprep.subr.mxu0 0.0
    %175 = vmatpush1.msra.mxu0 0.0
    %176 = vmatprep.subr.mxu0 0.0
    %177 = vmatpush1.msra.mxu0 0.0
    %178 = vmatprep.subr.mxu0 0.0
    %179 = vmatpush1.msra.mxu0 0.0
    %180 = vmatprep.subr.mxu0 0.0
    %181 = vmatpush1.msra.mxu0 0.0
    %182 = vmatprep.subr.mxu0 0.0
    %183 = vmatpush1.msra.mxu0 0.0
    %184 = vmatprep.subr.mxu0 0.0
    %185 = vmatpush1.msra.mxu0 0.0
    %186 = vmatprep.subr.mxu0 0.0
    %187 = vmatpush1.msra.mxu0 0.0
    %188 = vmatprep.subr.mxu0 0.0
    %189 = vmatpush1.msra.mxu0 0.0
    %190 = vmatprep.subr.mxu0 0.0
    %191 = vmatpush1.msra.mxu0 0.0
    %192 = vmatprep.subr.mxu0 0.0
    %193 = vmatpush1.msra.mxu0 0.0
    %194 = vmatprep.subr.mxu0 0.0
    %195 = vmatpush1.msra.mxu0 0.0
    %196 = vmatprep.subr.mxu0 0.0
    %197 = vmatpush1.msra.mxu0 0.0
    %198 = vmatprep.subr.mxu0 0.0
    %199 = vmatpush1.msra.mxu0 0.0
    %200 = vmatprep.subr.mxu0 0.0
    %201 = vmatpush1.msra.mxu0 0.0
    %202 = vmatprep.subr.mxu0 0.0
    %203 = vmatpush1.msra.mxu0 0.0
    %204 = vmatprep.subr.mxu0 0.0
    %205 = vmatpush1.msra.mxu0 0.0
    %206 = vmatprep.subr.mxu0 0.0
    %207 = vmatpush1.msra.mxu0 0.0
    %208 = vmatprep.subr.mxu0 0.0
    %209 = vmatpush1.msra.mxu0 0.0
    %210 = vmatprep.subr.mxu0 0.0
    %211 = vmatpush1.msra.mxu0 0.0
    %212 = vmatprep.mubr.f32.mxu0 0.0
    %213 = vmatmul.mubr.f32.gmra.mrb[0].mxu0 %v146
    %v214 = vpop.f32.mrb[0].mxu0
    %v215 = vadd.f32 0.0, %v214
    %v216 = vpop.f32.mrb[0].mxu0
    %217 = vdwg.mxu0
    %vm218 = vcmp.gt.f32.partialorder %v215, 0.5
    %v219 = vld [vmem:[%s95] sm:$0xff]
    %v220 = vsel %vm218, %v219, 0.0
    %v221 = vld [vmem:[%s111] sm:$0xff]
    %v222 = vsel %vm218, %v221, 0.0
    %v223 = vadd.f32 %v220, 0.0
    %v224 = vadd.f32 %v222, 0.0
    %v225 = vmul.f32 %v220, %v222
    %v226 = vadd.f32 %v225, 0.0
    %v227 = vmul.f32 %v220, %v220
    %v228 = vadd.f32 %v227, 0.0
    %v229 = vmul.f32 %v222, %v222
    %v230 = vadd.f32 %v229, 0.0
    %v231 = vld [vmem:[%s4] sm:$0xff]
    %v232 = vld [vmem:[%s4 + $0x8] sm:$0xff]
    %v233 = vld [vmem:[%s4 + $0x10] sm:$0xff]
    %v234 = vld [vmem:[%s4 + $0x18] sm:$0xff]
    %v235 = vld [vmem:[%s4 + $0x20] sm:$0xff]
    %v236 = vadd.f32 %v231, %v223
    %v237 = vadd.f32 %v232, %v224
    %v238 = vadd.f32 %v233, %v226
    %v239 = vadd.f32 %v234, %v228
    %v240 = vadd.f32 %v235, %v230
    %241 = vst [vmem:[%s4] sm:$0xff] %v236
    %242 = vst [vmem:[%s4 + $0x8] sm:$0xff] %v237
    %243 = vst [vmem:[%s4 + $0x10] sm:$0xff] %v238
    %244 = vst [vmem:[%s4 + $0x18] sm:$0xff] %v239
    %245 = vst [vmem:[%s4 + $0x20] sm:$0xff] %v240
  $region25: #{masked_pcc_loss.1} parent=0 // pred_fallthru
    _
  // Predicated region
  $region26: #{masked_pcc_loss.1} parent=0 // pred_check
    _
  $region27: #{masked_pcc_loss.1} parent=0 // pred_check_branch
    %247 = sbr.rel (0) target = $region29
  $region28: #{masked_pcc_loss.1} parent=0 // pred_region
    _
  $region29: #{masked_pcc_loss.1} parent=0 // pred_fallthru
    _
  // Predicated region
  $region30: #{masked_pcc_loss.1} parent=0 // pred_check
    _
  $region31: #{masked_pcc_loss.1} parent=0 // pred_check_branch
    %249 = sbr.rel (0) target = $region33
  $region32: #{masked_pcc_loss.1} parent=0 // pred_region
    _
  $region33: #{masked_pcc_loss.1} parent=0 // pred_fallthru
    _

</llo_original>
